<compile_context>
chip_gen: v6e
topology: v6e:2x2x1
jax: 0.10.0
libtpu: 0.0.40
codegen_flags: <defaults>
</compile_context>

<pallas_src>
import functools

import jax
import jax.numpy as jnp
from jax import lax
from jax.experimental import pallas as pl
from jax.experimental.pallas import tpu as pltpu

SQRT_HALF = 0.7071067811865476


def wavenet_block_kernel(x_ref, w1_ref, b1_ref, w2_ref, b2_ref, o_ref,
                         xpad_ref, *, C, T, K, dilation, block_n, t_chunk,
                         compute_dtype):
    """One grid step = `block_n` batch elements.

    x_ref    : (block_n, C, T)   input (also the outer residual)
    w1_ref   : (K, 4C, C)        per-tap dilated-conv weights (compute dtype)
    b1_ref   : (4C, 1)           dilated-conv bias (f32)
    w2_ref   : (2C, C)           1x1-conv weights (compute dtype)
    b2_ref   : (2C, 1)           1x1-conv bias (f32)
    o_ref    : (block_n, C, T)   output
    xpad_ref : (C, T + 2L) VMEM  time-padded staging buffer (halo columns = 0)
    """
    cdt = compute_dtype
    L = ((K - 1) * dilation) // 2            # symmetric non-causal halo

    # Zero the halo columns (tiny; redone every grid step so it also holds when
    # the "parallel" grid axis is split across TensorCores).
    if L > 0:
        xpad_ref[:, :L] = jnp.zeros((C, L), cdt)
        xpad_ref[:, L + T:] = jnp.zeros((C, L), cdt)

    b1 = b1_ref[...].astype(jnp.float32)     # (4C, 1), lane-broadcast on use
    b2 = b2_ref[...].astype(jnp.float32)     # (2C, 1)
    n_chunks = T // t_chunk

    def per_batch(n, carry):
        # ONE bf16 staging store per batch element; every dilated tap is then a
        # cheap lane-shifted VMEM load (no K-fold duplication of x).
        xpad_ref[:, L:L + T] = x_ref[n].astype(cdt)

        # Time-chunked compute: a chunk's intermediates stay in vregs so MXU,
        # VPU/EUP and the dense output stores of neighbouring chunks overlap.
        for tc in range(n_chunks):                        # static, small
            t0 = tc * t_chunk

            # Dilated non-causal Conv1d (C -> 4C): K shifted-tap matmuls with
            # f32 accumulation; bias as a broadcast VPU add (no ones row).
            acc = None
            for j in range(K):                            # static taps
                tap = xpad_ref[:, t0 + j * dilation:
                               t0 + j * dilation + t_chunk]
                d = jnp.dot(w1_ref[j], tap,
                            preferred_element_type=jnp.float32)
                acc = d if acc is None else acc + d
            acc = acc + b1                                # (4C, t_chunk) f32

            # ConvBlockE #1: GLU -> relu -> * sqrt(0.5)  (no residual: 2C != C)
            h = acc[:2 * C] * jax.nn.sigmoid(acc[2 * C:])
            h = jnp.maximum(h, 0.0) * SQRT_HALF
            # WaveNetBlock gate: split channels in half, tanh * sigmoid.
            z = jnp.tanh(h[:C]) * jax.nn.sigmoid(h[C:])   # (C, t_chunk) f32

            # 1x1 ConvBlockE (C -> C): conv -> GLU -> +z -> relu -> * sqrt(0.5)
            # (z feeds the matmul directly from vregs; no scratch round trip.)
            acc2 = jnp.dot(w2_ref[...], z.astype(cdt),
                           preferred_element_type=jnp.float32) + b2
            g = acc2[:C] * jax.nn.sigmoid(acc2[C:])
            g = jnp.maximum(g + z, 0.0) * SQRT_HALF

            # Outer WaveNet residual; lane-aligned dense (C, t_chunk) store.
            x_res = x_ref[n, :, t0:t0 + t_chunk].astype(jnp.float32)
            o_ref[n, :, t0:t0 + t_chunk] = (g + x_res).astype(o_ref.dtype)
        return carry

    lax.fori_loop(0, block_n, per_batch, 0, unroll=block_n <= 4)


def _vmem_capacity_bytes():
    try:
        return int(getattr(pltpu.get_tpu_info(), "vmem_capacity_bytes",
                           64 << 20))
    except Exception:
        return 64 << 20        # conservative (v7x per-TensorCore VMEM)


def _pick_block_n(N, C, T, target_bytes):
    """Largest divisor of N fitting the per-step VMEM budget, preferring a grid
    of >= 2 steps so both TensorCores (v7x megacore) get work."""
    per_elem = 16 * C * T      # double-buffered f32 x and out blocks
    cap = max(1, target_bytes // per_elem)
    divisors = [d for d in range(1, N + 1) if N % d == 0]
    fitting = [d for d in divisors if d <= cap] or [1]
    multi = [d for d in fitting if N // d >= 2]
    return max(multi) if multi else max(fitting)


def wavenet_block(x, w1, b1, w2, b2, *, kernel_size, dilation,
                  compute_dtype=jnp.bfloat16, block_n=None):
    """x: (N, C, T); w1: (4C, C, K), b1: (4C,), w2: (2C, C, 1), b2: (2C,)
    (PyTorch Conv1d parameter layouts)."""
    N, C, T = x.shape
    K = kernel_size
    assert K % 2 == 1, "kernel_size must be odd"
    assert w1.shape == (4 * C, C, K)
    pad = (K - 1) * dilation
    assert pad // 2 < T, "pad must be smaller than sequence"

    # Lane-dense tiles: pad time to a multiple of 128 (zero time-padding is
    # exactly equivalent for the first T outputs; sliced off below).
    T_pad = ((T + 127) // 128) * 128
    x_in = x if T_pad == T else jnp.pad(x, ((0, 0), (0, 0), (0, T_pad - T)))

    vmem_cap = _vmem_capacity_bytes()
    if block_n is None:
        block_n = _pick_block_n(N, C, T_pad, target_bytes=vmem_cap // 4)
    assert N % block_n == 0, "block_n must divide batch size"

    # In-kernel time-chunk width (multiple of 128 lanes, capped at 512).
    t_chunk = 512 if T_pad % 512 == 0 else (256 if T_pad % 256 == 0 else 128)

    # Per-tap weight layout (K, 4C, C) so each tap is a static leading index;
    # biases stay f32 and are added with a VPU broadcast (no augmentation).
    w1_taps = jnp.transpose(w1, (2, 0, 1)).astype(compute_dtype)
    b1c = b1.reshape(4 * C, 1).astype(jnp.float32)
    w2m = w2.reshape(2 * C, C).astype(compute_dtype)
    b2c = b2.reshape(2 * C, 1).astype(jnp.float32)

    kern = functools.partial(
        wavenet_block_kernel, C=C, T=T_pad, K=K, dilation=dilation,
        block_n=block_n, t_chunk=t_chunk, compute_dtype=compute_dtype)

    # Explicit per-generation VMEM budget: ~4x the double-buffered block
    # footprint, clamped to 3/4 of physical VMEM (64 MiB v7x, 128 MiB v5e/v6e).
    per_step = (16 * block_n * C * T_pad          # f32 x + out, double-buffered
                + 2 * C * (T_pad + pad)           # bf16 padded staging scratch
                + 2 * (K * 4 * C * C + 2 * C * C) # weights
                + 6 * 4 * C)                      # biases
    vmem_limit = int(min(vmem_cap * 3 // 4, max(4 * per_step, 32 << 20)))

    out = pl.pallas_call(
        kern,
        out_shape=jax.ShapeDtypeStruct((N, C, T_pad), x.dtype),
        grid_spec=pltpu.PrefetchScalarGridSpec(
            num_scalar_prefetch=0,
            grid=(N // block_n,),
            in_specs=[
                pl.BlockSpec((block_n, C, T_pad), lambda b: (b, 0, 0)),
                pl.BlockSpec((K, 4 * C, C), lambda b: (0, 0, 0)),
                pl.BlockSpec((4 * C, 1), lambda b: (0, 0)),
                pl.BlockSpec((2 * C, C), lambda b: (0, 0)),
                pl.BlockSpec((2 * C, 1), lambda b: (0, 0)),
            ],
            out_specs=pl.BlockSpec((block_n, C, T_pad), lambda b: (b, 0, 0)),
            scratch_shapes=[
                pltpu.VMEM((C, T_pad + 2 * (pad // 2)), compute_dtype),
            ],
        ),
        compiler_params=pltpu.CompilerParams(
            dimension_semantics=("parallel",),
            vmem_limit_bytes=vmem_limit),
    )(x_in, w1_taps, b1c, w2m, b2c)
    return out if T_pad == T else out[:, :, :T]


def ref_wavenet_block(x, w1, b1, w2, b2, *, kernel_size, dilation,
                      compute_dtype=jnp.bfloat16):
    """Pure-JAX reference mirroring the kernel's precision policy
    (bf16 matmul operands, f32 accumulation / biases / elementwise)."""
    N, C, T = x.shape
    K = kernel_size
    pad = (K - 1) * dilation
    L = pad // 2
    xp = jnp.pad(x, ((0, 0), (0, 0), (L, pad - L))).astype(compute_dtype)
    w1c = w1.astype(compute_dtype)
    w2c = w2.reshape(2 * C, C).astype(compute_dtype)
    b1c = b1.astype(jnp.float32).reshape(1, 4 * C, 1)
    b2c = b2.astype(jnp.float32).reshape(1, 2 * C, 1)

    acc = jnp.zeros((N, 4 * C, T), jnp.float32)
    for j in range(K):
        acc = acc + jnp.einsum('oi,nit->not', w1c[:, :, j],
                               xp[:, :, j * dilation:j * dilation + T],
                               preferred_element_type=jnp.float32)
    acc = acc + b1c
    h = acc[:, :2 * C] * jax.nn.sigmoid(acc[:, 2 * C:])
    h = jnp.maximum(h, 0.0) * SQRT_HALF
    z = jnp.tanh(h[:, :C]) * jax.nn.sigmoid(h[:, C:])
    acc2 = jnp.einsum('oi,nit->not', w2c, z.astype(compute_dtype),
                      preferred_element_type=jnp.float32) + b2c
    g = acc2[:, :C] * jax.nn.sigmoid(acc2[:, C:])
    g = jnp.maximum(g + z, 0.0) * SQRT_HALF
    return (g + x.astype(jnp.float32)).astype(x.dtype)


if __name__ == "__main__":
    # Small shapes: in_channels C=8, out_channels 2C=16, T=128, batch N=2.
    N, C, T = 2, 8, 128
    kernel_size, dilation = 3, 2

    key = jax.random.PRNGKey(0)
    kx, kw1, kb1, kw2, kb2 = jax.random.split(key, 5)

    x = jax.random.normal(kx, (N, C, T), dtype=jnp.float32)
    # PyTorch Conv1d parameter layouts: weight (out_ch, in_ch, K), bias (out_ch,).
    w1 = 0.1 * jax.random.normal(kw1, (4 * C, C, kernel_size), dtype=jnp.float32)
    b1 = 0.01 * jax.random.normal(kb1, (4 * C,), dtype=jnp.float32)
    w2 = 0.1 * jax.random.normal(kw2, (2 * C, C, 1), dtype=jnp.float32)
    b2 = 0.01 * jax.random.normal(kb2, (2 * C,), dtype=jnp.float32)

    out = wavenet_block(x, w1, b1, w2, b2,
                        kernel_size=kernel_size, dilation=dilation)
    out = jax.block_until_ready(out)

    ref = ref_wavenet_block(x, w1, b1, w2, b2,
                            kernel_size=kernel_size, dilation=dilation)
    assert out.shape == (N, C, T)
    max_err = float(jnp.max(jnp.abs(out - ref)))
    assert jnp.allclose(out, ref, atol=2e-3, rtol=2e-3), (
        f"mismatch vs JAX reference, max|err|={max_err}")

    print("KERNEL_OK")
</pallas_src>

<mosaic_0001>
module attributes {stable_mosaic.version = 11 : i64} {
  func.func @wavenet_block_kernel(%arg0: i32, %arg1: memref<1x8x128xf32, #tpu.memory_space<vmem>>, %arg2: memref<3x32x8xbf16, #tpu.memory_space<vmem>>, %arg3: memref<32x1xf32, #tpu.memory_space<vmem>>, %arg4: memref<16x8xbf16, #tpu.memory_space<vmem>>, %arg5: memref<16x1xf32, #tpu.memory_space<vmem>>, %arg6: memref<1x8x128xf32, #tpu.memory_space<vmem>>, %arg7: memref<8x132xbf16, #tpu.memory_space<vmem>>) attributes {dimension_semantics = [#tpu.dimension_semantics<parallel>], iteration_bounds = array<i64: 2>, scalar_prefetch = 0 : i64, scratch_operands = 1 : i64, tpu.core_type = #tpu.core_type<tc>, window_params = [{transform_indices = @transform_0, window_bounds = array<i64: 1, 8, 128>}, {pipeline_mode = #tpu.pipeline_mode<synchronous>, transform_indices = @transform_1, window_bounds = array<i64: 3, 32, 8>}, {pipeline_mode = #tpu.pipeline_mode<synchronous>, transform_indices = @transform_2, window_bounds = array<i64: 32, 1>}, {pipeline_mode = #tpu.pipeline_mode<synchronous>, transform_indices = @transform_3, window_bounds = array<i64: 16, 8>}, {pipeline_mode = #tpu.pipeline_mode<synchronous>, transform_indices = @transform_4, window_bounds = array<i64: 16, 1>}, {transform_indices = @transform_5, window_bounds = array<i64: 1, 8, 128>}]} {
    %cst = arith.constant 0.000000e+00 : bf16
    %0 = vector.broadcast %cst : bf16 to vector<8x2xbf16>
    %c0 = arith.constant 0 : index
    %c0_0 = arith.constant 0 : index
    %1 = vector.load %arg7[%c0, %c0_0] : memref<8x132xbf16, #tpu.memory_space<vmem>>, vector<8x2xbf16>
    tpu.vector_store %arg7[%c0, %c0_0], %0 {strides = array<i32>} : memref<8x132xbf16, #tpu.memory_space<vmem>>, vector<8x2xbf16>,
    %cst_1 = arith.constant 0.000000e+00 : bf16
    %2 = vector.broadcast %cst_1 : bf16 to vector<8x2xbf16>
    %c0_2 = arith.constant 0 : index
    %c130 = arith.constant 130 : index
    %3 = vector.load %arg7[%c0_2, %c130] : memref<8x132xbf16, #tpu.memory_space<vmem>>, vector<8x2xbf16>
    tpu.vector_store %arg7[%c0_2, %c130], %2 {strides = array<i32>} : memref<8x132xbf16, #tpu.memory_space<vmem>>, vector<8x2xbf16>,
    %c0_3 = arith.constant 0 : index
    %c0_4 = arith.constant 0 : index
    %4 = vector.load %arg3[%c0_3, %c0_4] : memref<32x1xf32, #tpu.memory_space<vmem>>, vector<32x1xf32>
    %c0_5 = arith.constant 0 : index
    %c0_6 = arith.constant 0 : index
    %5 = vector.load %arg5[%c0_5, %c0_6] : memref<16x1xf32, #tpu.memory_space<vmem>>, vector<16x1xf32>
    %c0_i32 = arith.constant 0 : i32
    %6 = arith.index_cast %c0_i32 : i32 to index
    %c0_7 = arith.constant 0 : index
    %c0_8 = arith.constant 0 : index
    %7 = vector.load %arg1[%6, %c0_7, %c0_8] : memref<1x8x128xf32, #tpu.memory_space<vmem>>, vector<1x8x128xf32>
    %8 = vector.shape_cast %7 : vector<1x8x128xf32> to vector<8x128xf32>
    %9 = arith.truncf %8 : vector<8x128xf32> to vector<8x128xbf16>
    %c0_9 = arith.constant 0 : index
    %c2 = arith.constant 2 : index
    %10 = vector.load %arg7[%c0_9, %c2] : memref<8x132xbf16, #tpu.memory_space<vmem>>, vector<8x128xbf16>
    tpu.vector_store %arg7[%c0_9, %c2], %9 {strides = array<i32>} : memref<8x132xbf16, #tpu.memory_space<vmem>>, vector<8x128xbf16>,
    %c0_10 = arith.constant 0 : index
    %c0_11 = arith.constant 0 : index
    %11 = vector.load %arg7[%c0_10, %c0_11] : memref<8x132xbf16, #tpu.memory_space<vmem>>, vector<8x128xbf16>
    %c0_12 = arith.constant 0 : index
    %c0_13 = arith.constant 0 : index
    %c0_14 = arith.constant 0 : index
    %12 = vector.load %arg2[%c0_12, %c0_13, %c0_14] : memref<3x32x8xbf16, #tpu.memory_space<vmem>>, vector<1x32x8xbf16>
    %13 = vector.shape_cast %12 : vector<1x32x8xbf16> to vector<32x8xbf16>
    %cst_15 = arith.constant dense<0.000000e+00> : vector<32x128xf32>
    %14 = tpu.matmul %13, %11, %cst_15 {dimension_numbers = #tpu.dot_dimension_numbers<[1], [0], [0], [1], [0, 0, 1, 1], [], []>} : vector<32x8xbf16>, vector<8x128xbf16>, vector<32x128xf32> -> vector<32x128xf32>
    %c0_16 = arith.constant 0 : index
    %c2_17 = arith.constant 2 : index
    %15 = vector.load %arg7[%c0_16, %c2_17] : memref<8x132xbf16, #tpu.memory_space<vmem>>, vector<8x128xbf16>
    %c1 = arith.constant 1 : index
    %c0_18 = arith.constant 0 : index
    %c0_19 = arith.constant 0 : index
    %16 = vector.load %arg2[%c1, %c0_18, %c0_19] : memref<3x32x8xbf16, #tpu.memory_space<vmem>>, vector<1x32x8xbf16>
    %17 = vector.shape_cast %16 : vector<1x32x8xbf16> to vector<32x8xbf16>
    %cst_20 = arith.constant dense<0.000000e+00> : vector<32x128xf32>
    %18 = tpu.matmul %17, %15, %cst_20 {dimension_numbers = #tpu.dot_dimension_numbers<[1], [0], [0], [1], [0, 0, 1, 1], [], []>} : vector<32x8xbf16>, vector<8x128xbf16>, vector<32x128xf32> -> vector<32x128xf32>
    %19 = arith.addf %14, %18 : vector<32x128xf32>
    %c0_21 = arith.constant 0 : index
    %c4 = arith.constant 4 : index
    %20 = vector.load %arg7[%c0_21, %c4] : memref<8x132xbf16, #tpu.memory_space<vmem>>, vector<8x128xbf16>
    %c2_22 = arith.constant 2 : index
    %c0_23 = arith.constant 0 : index
    %c0_24 = arith.constant 0 : index
    %21 = vector.load %arg2[%c2_22, %c0_23, %c0_24] : memref<3x32x8xbf16, #tpu.memory_space<vmem>>, vector<1x32x8xbf16>
    %22 = vector.shape_cast %21 : vector<1x32x8xbf16> to vector<32x8xbf16>
    %cst_25 = arith.constant dense<0.000000e+00> : vector<32x128xf32>
    %23 = tpu.matmul %22, %20, %cst_25 {dimension_numbers = #tpu.dot_dimension_numbers<[1], [0], [0], [1], [0, 0, 1, 1], [], []>} : vector<32x8xbf16>, vector<8x128xbf16>, vector<32x128xf32> -> vector<32x128xf32>
    %24 = arith.addf %19, %23 : vector<32x128xf32>
    %25 = vector.broadcast %4 : vector<32x1xf32> to vector<32x128xf32>
    %26 = arith.addf %24, %25 : vector<32x128xf32>
    %27 = vector.extract_strided_slice %26 {offsets = [0, 0], sizes = [16, 128], strides = [1, 1]} : vector<32x128xf32> to vector<16x128xf32>
    %28 = vector.extract_strided_slice %26 {offsets = [16, 0], sizes = [16, 128], strides = [1, 1]} : vector<32x128xf32> to vector<16x128xf32>
    %29 = arith.negf %28 : vector<16x128xf32>
    %30 = math.exp %29 : vector<16x128xf32>
    %cst_26 = arith.constant 1.000000e+00 : f32
    %31 = vector.broadcast %cst_26 : f32 to vector<16x128xf32>
    %32 = arith.addf %31, %30 : vector<16x128xf32>
    %33 = arith.divf %31, %32 : vector<16x128xf32>
    %34 = arith.mulf %27, %33 : vector<16x128xf32>
    %cst_27 = arith.constant 0.000000e+00 : f32
    %35 = vector.broadcast %cst_27 : f32 to vector<16x128xf32>
    %36 = arith.maximumf %34, %35 : vector<16x128xf32>
    %cst_28 = arith.constant 0.707106769 : f32
    %37 = vector.broadcast %cst_28 : f32 to vector<16x128xf32>
    %38 = arith.mulf %36, %37 : vector<16x128xf32>
    %39 = vector.extract_strided_slice %38 {offsets = [0, 0], sizes = [8, 128], strides = [1, 1]} : vector<16x128xf32> to vector<8x128xf32>
    %40 = math.tanh %39 : vector<8x128xf32>
    %41 = vector.extract_strided_slice %38 {offsets = [8, 0], sizes = [8, 128], strides = [1, 1]} : vector<16x128xf32> to vector<8x128xf32>
    %42 = arith.negf %41 : vector<8x128xf32>
    %43 = math.exp %42 : vector<8x128xf32>
    %cst_29 = arith.constant 1.000000e+00 : f32
    %44 = vector.broadcast %cst_29 : f32 to vector<8x128xf32>
    %45 = arith.addf %44, %43 : vector<8x128xf32>
    %46 = arith.divf %44, %45 : vector<8x128xf32>
    %47 = arith.mulf %40, %46 : vector<8x128xf32>
    %c0_30 = arith.constant 0 : index
    %c0_31 = arith.constant 0 : index
    %48 = vector.load %arg4[%c0_30, %c0_31] : memref<16x8xbf16, #tpu.memory_space<vmem>>, vector<16x8xbf16>
    %49 = arith.truncf %47 : vector<8x128xf32> to vector<8x128xbf16>
    %cst_32 = arith.constant dense<0.000000e+00> : vector<16x128xf32>
    %50 = tpu.matmul %48, %49, %cst_32 {dimension_numbers = #tpu.dot_dimension_numbers<[1], [0], [0], [1], [0, 0, 1, 1], [], []>} : vector<16x8xbf16>, vector<8x128xbf16>, vector<16x128xf32> -> vector<16x128xf32>
    %51 = vector.broadcast %5 : vector<16x1xf32> to vector<16x128xf32>
    %52 = arith.addf %50, %51 : vector<16x128xf32>
    %53 = vector.extract_strided_slice %52 {offsets = [0, 0], sizes = [8, 128], strides = [1, 1]} : vector<16x128xf32> to vector<8x128xf32>
    %54 = vector.extract_strided_slice %52 {offsets = [8, 0], sizes = [8, 128], strides = [1, 1]} : vector<16x128xf32> to vector<8x128xf32>
    %55 = arith.negf %54 : vector<8x128xf32>
    %56 = math.exp %55 : vector<8x128xf32>
    %cst_33 = arith.constant 1.000000e+00 : f32
    %57 = vector.broadcast %cst_33 : f32 to vector<8x128xf32>
    %58 = arith.addf %57, %56 : vector<8x128xf32>
    %59 = arith.divf %57, %58 : vector<8x128xf32>
    %60 = arith.mulf %53, %59 : vector<8x128xf32>
    %61 = arith.addf %60, %47 : vector<8x128xf32>
    %cst_34 = arith.constant 0.000000e+00 : f32
    %62 = vector.broadcast %cst_34 : f32 to vector<8x128xf32>
    %63 = arith.maximumf %61, %62 : vector<8x128xf32>
    %cst_35 = arith.constant 0.707106769 : f32
    %64 = vector.broadcast %cst_35 : f32 to vector<8x128xf32>
    %65 = arith.mulf %63, %64 : vector<8x128xf32>
    %66 = arith.index_cast %c0_i32 : i32 to index
    %c0_36 = arith.constant 0 : index
    %c0_37 = arith.constant 0 : index
    %67 = vector.load %arg1[%66, %c0_36, %c0_37] : memref<1x8x128xf32, #tpu.memory_space<vmem>>, vector<1x8x128xf32>
    %68 = vector.shape_cast %67 : vector<1x8x128xf32> to vector<8x128xf32>
    %69 = arith.addf %65, %68 : vector<8x128xf32>
    %70 = arith.index_cast %c0_i32 : i32 to index
    %c0_38 = arith.constant 0 : index
    %c0_39 = arith.constant 0 : index
    %71 = vector.load %arg6[%70, %c0_38, %c0_39] : memref<1x8x128xf32, #tpu.memory_space<vmem>>, vector<1x8x128xf32>
    %72 = vector.shape_cast %71 : vector<1x8x128xf32> to vector<8x128xf32>
    %73 = vector.shape_cast %69 : vector<8x128xf32> to vector<1x8x128xf32>
    tpu.vector_store %arg6[%70, %c0_38, %c0_39], %73 {strides = array<i32>} : memref<1x8x128xf32, #tpu.memory_space<vmem>>, vector<1x8x128xf32>,
    %c1_i32 = arith.constant 1 : i32
    return
  }
  func.func @transform_0(%arg0: i32) -> (i32, i32, i32) {
    %c0_i32 = arith.constant 0 : i32
    %c0_i32_0 = arith.constant 0 : i32
    %c0_i32_1 = arith.constant 0 : i32
    return %arg0, %c0_i32, %c0_i32_0 : i32, i32, i32
  }
  func.func @transform_1(%arg0: i32) -> (i32, i32, i32) {
    %c0_i32 = arith.constant 0 : i32
    %c0_i32_0 = arith.constant 0 : i32
    %c0_i32_1 = arith.constant 0 : i32
    %c0_i32_2 = arith.constant 0 : i32
    return %c0_i32, %c0_i32_0, %c0_i32_1 : i32, i32, i32
  }
  func.func @transform_2(%arg0: i32) -> (i32, i32) {
    %c0_i32 = arith.constant 0 : i32
    %c0_i32_0 = arith.constant 0 : i32
    %c0_i32_1 = arith.constant 0 : i32
    return %c0_i32, %c0_i32_0 : i32, i32
  }
  func.func @transform_3(%arg0: i32) -> (i32, i32) {
    %c0_i32 = arith.constant 0 : i32
    %c0_i32_0 = arith.constant 0 : i32
    %c0_i32_1 = arith.constant 0 : i32
    return %c0_i32, %c0_i32_0 : i32, i32
  }
  func.func @transform_4(%arg0: i32) -> (i32, i32) {
    %c0_i32 = arith.constant 0 : i32
    %c0_i32_0 = arith.constant 0 : i32
    %c0_i32_1 = arith.constant 0 : i32
    return %c0_i32, %c0_i32_0 : i32, i32
  }
  func.func @transform_5(%arg0: i32) -> (i32, i32, i32) {
    %c0_i32 = arith.constant 0 : i32
    %c0_i32_0 = arith.constant 0 : i32
    %c0_i32_1 = arith.constant 0 : i32
    return %arg0, %c0_i32, %c0_i32_0 : i32, i32, i32
  }
}

</mosaic_0001>

<llo_original>
// kernel: tpu_custom_call.1
$region0: #{tpu_custom_call.1}
  #allocation0 [shape = 'u32[]', space=smem, size = 0x4, offset = 0x4, fixed_abs, tag = 'smem constant byte address 0x4 - core index']
  #allocation1 [shape = 'u32[144,128]{1,0:T(1,128)}', space=vmem, size = 0x12000, scoped, tag = 'internal scratch']
  #allocation2 [shape = 'bf16[8,132]{1,0:T(8,128)(2,1)}', space=vmem, size = 0x1000, scoped, tag = 'scratch operand']
  %s0 = inlined_call_operand.vmem [shape: f32[2,8,128], index: 0, kind: input, shape index: {}]
  %s1 = inlined_call_operand.vmem [shape: bf16[3,32,8], index: 1, kind: input, shape index: {}]
  %s2 = inlined_call_operand.vmem [shape: f32[32,1], index: 2, kind: input, shape index: {}]
  %s3 = inlined_call_operand.vmem [shape: bf16[16,8], index: 3, kind: input, shape index: {}]
  %s4 = inlined_call_operand.vmem [shape: f32[16,1], index: 4, kind: input, shape index: {}]
  %s5 = inlined_call_operand.hbm [shape: f32[2,8,128], index: 5, kind: output, shape index: {}]
  %s6 = sld [smem:[#allocation0]]
  $region53: #{tpu_custom_call.1} parent=0
    _
  %s8 = ssub.s32 1, %s6
  %s9 = scalar_select 0, %s8, %s6
  $region1: #{tpu_custom_call.1} parent=0
    #allocation3 [shape = 'u8[8192]{0}', space=vmem, size = 0x2000, scoped, tag = 'output window, operand 0']
    #allocation4 [shape = 's32[2]{0}', space=sflag, size = 0x8, scoped, tag = 'scoped memory for tpu_custom_call.1']
    %10 = vsyncpa [#allocation4], 0
    %s11 = scalar_lea.sflag [#allocation4], 1
    %12 = vsyncpa %s11, 0
    loop: start=0, step=1, limit=4
    $region2: #{tpu_custom_call.1} parent=1 // loop_pre_header
      _
    $region3: #{tpu_custom_call.1} parent=1 // loop_header
      %s14 = sphi 0, %s18
      %p15 = scmp.ge.s32.totalorder %s14, 4
      %s24 = sphi 0, %s26
      %s27 = sphi 0, %s24
      %s28 = sphi 0, %s27
      %s44 = sphi 0, %s28
      %s48 = sphi 0, %s48
      %s50 = sphi 0, %s48
      %s51 = sphi 0, %s50
      %s65 = sphi 0, %s51
      %s69 = sphi 0, %s69
      %s71 = sphi 0, %s69
      %s72 = sphi 0, %s71
      %s86 = sphi 0, %s72
      %s90 = sphi 0, %s90
      %s92 = sphi 0, %s90
      %s93 = sphi 0, %s92
      %s107 = sphi 0, %s93
      %s111 = sphi 0, %s111
      %s113 = sphi 0, %s111
      %s114 = sphi 0, %s113
      %s128 = sphi 0, %s114
      %s134 = sphi 0, %s136
      %s137 = sphi 0, %s134
      %s138 = sphi 0, %s137
      %s154 = sphi 0, %s138
    $region4: #{tpu_custom_call.1} parent=1 // loop_header_branch
      %17 = sbr.rel (%p15) target = $region8
    $region5: #{tpu_custom_call.1} parent=1 // loop_body
      %s19 = ssub.s32 %s14, 1
      %s20 = ssub.s32 %s14, 2
      %s21 = sadd.s32 %s14, 1
      %s22 = ssub.s32 %s14, %s21
      %p23 = scmp.eq.s32.totalorder %s22, 0
      %s25 = sadd.s32 %s24, 1
      %s26 = scalar_select %p23, %s24, %s25
      %p29 = pneg %p23
      %p30 = scmp.eq.s32.totalorder %s14, 1
      %p31 = por %p29, %p30
      %p32 = scmp.ne.s32.totalorder %s24, %s27
      %p33 = scmp.eq.s32.totalorder %s14, 0
      %p34 = por %p32, %p33
      %p35 = scmp.ne.s32.totalorder %s24, %s27
      %p36 = scmp.eq.s32.totalorder %s19, 1
      %p37 = por %p35, %p36
      %p38 = scmp.ne.s32.totalorder %s27, %s28
      %p39 = scmp.eq.s32.totalorder %s19, 0
      %p40 = por %p38, %p39
      %p41 = scmp.ne.s32.totalorder %s27, %s28
      %p42 = scmp.eq.s32.totalorder %s20, 1
      %p43 = por %p41, %p42
      %p45 = scmp.ne.s32.totalorder %s28, %s44
      %p46 = scmp.eq.s32.totalorder %s20, 0
      %p47 = por %p45, %p46
      %s49 = sadd.s32 %s48, 1
      %p52 = scmp.eq.s32.totalorder %s14, 1
      %p53 = scmp.ne.s32.totalorder %s48, %s50
      %p54 = scmp.eq.s32.totalorder %s14, 0
      %p55 = por %p53, %p54
      %p56 = scmp.ne.s32.totalorder %s48, %s50
      %p57 = scmp.eq.s32.totalorder %s19, 1
      %p58 = por %p56, %p57
      %p59 = scmp.ne.s32.totalorder %s50, %s51
      %p60 = scmp.eq.s32.totalorder %s19, 0
      %p61 = por %p59, %p60
      %p62 = scmp.ne.s32.totalorder %s50, %s51
      %p63 = scmp.eq.s32.totalorder %s20, 1
      %p64 = por %p62, %p63
      %p66 = scmp.ne.s32.totalorder %s51, %s65
      %p67 = scmp.eq.s32.totalorder %s20, 0
      %p68 = por %p66, %p67
      %s70 = sadd.s32 %s69, 1
      %p73 = scmp.eq.s32.totalorder %s14, 1
      %p74 = scmp.ne.s32.totalorder %s69, %s71
      %p75 = scmp.eq.s32.totalorder %s14, 0
      %p76 = por %p74, %p75
      %p77 = scmp.ne.s32.totalorder %s69, %s71
      %p78 = scmp.eq.s32.totalorder %s19, 1
      %p79 = por %p77, %p78
      %p80 = scmp.ne.s32.totalorder %s71, %s72
      %p81 = scmp.eq.s32.totalorder %s19, 0
      %p82 = por %p80, %p81
      %p83 = scmp.ne.s32.totalorder %s71, %s72
      %p84 = scmp.eq.s32.totalorder %s20, 1
      %p85 = por %p83, %p84
      %p87 = scmp.ne.s32.totalorder %s72, %s86
      %p88 = scmp.eq.s32.totalorder %s20, 0
      %p89 = por %p87, %p88
      %s91 = sadd.s32 %s90, 1
      %p94 = scmp.eq.s32.totalorder %s14, 1
      %p95 = scmp.ne.s32.totalorder %s90, %s92
      %p96 = scmp.eq.s32.totalorder %s14, 0
      %p97 = por %p95, %p96
      %p98 = scmp.ne.s32.totalorder %s90, %s92
      %p99 = scmp.eq.s32.totalorder %s19, 1
      %p100 = por %p98, %p99
      %p101 = scmp.ne.s32.totalorder %s92, %s93
      %p102 = scmp.eq.s32.totalorder %s19, 0
      %p103 = por %p101, %p102
      %p104 = scmp.ne.s32.totalorder %s92, %s93
      %p105 = scmp.eq.s32.totalorder %s20, 1
      %p106 = por %p104, %p105
      %p108 = scmp.ne.s32.totalorder %s93, %s107
      %p109 = scmp.eq.s32.totalorder %s20, 0
      %p110 = por %p108, %p109
      %s112 = sadd.s32 %s111, 1
      %p115 = scmp.eq.s32.totalorder %s14, 1
      %p116 = scmp.ne.s32.totalorder %s111, %s113
      %p117 = scmp.eq.s32.totalorder %s14, 0
      %p118 = por %p116, %p117
      %p119 = scmp.ne.s32.totalorder %s111, %s113
      %p120 = scmp.eq.s32.totalorder %s19, 1
      %p121 = por %p119, %p120
      %p122 = scmp.ne.s32.totalorder %s113, %s114
      %p123 = scmp.eq.s32.totalorder %s19, 0
      %p124 = por %p122, %p123
      %p125 = scmp.ne.s32.totalorder %s113, %s114
      %p126 = scmp.eq.s32.totalorder %s20, 1
      %p127 = por %p125, %p126
      %p129 = scmp.ne.s32.totalorder %s114, %s128
      %p130 = scmp.eq.s32.totalorder %s20, 0
      %p131 = por %p129, %p130
      %s132 = ssub.s32 %s14, %s21
      %p133 = scmp.eq.s32.totalorder %s132, 0
      %s135 = sadd.s32 %s134, 1
      %s136 = scalar_select %p133, %s134, %s135
      %p139 = pneg %p133
      %p140 = scmp.eq.s32.totalorder %s14, 1
      %p141 = por %p139, %p140
      %p142 = scmp.ne.s32.totalorder %s134, %s137
      %p143 = scmp.eq.s32.totalorder %s14, 0
      %p144 = por %p142, %p143
      %p145 = scmp.ne.s32.totalorder %s134, %s137
      %p146 = scmp.eq.s32.totalorder %s19, 1
      %p147 = por %p145, %p146
      %p148 = scmp.ne.s32.totalorder %s137, %s138
      %p149 = scmp.eq.s32.totalorder %s19, 0
      %p150 = por %p148, %p149
      %p151 = scmp.ne.s32.totalorder %s137, %s138
      %p152 = scmp.eq.s32.totalorder %s20, 1
      %p153 = por %p151, %p152
      %p155 = scmp.ne.s32.totalorder %s138, %s154
      %p156 = scmp.eq.s32.totalorder %s20, 0
      %p157 = por %p155, %p156
      %p158 = scmp.le.s32.totalorder 1, %s14
      %p159 = scmp.lt.s32.totalorder %s14, 3
      %p160 = pnand %p158, %p159
      %p161 = pneg %p160
      // Predicated region
      $region9: #{tpu_custom_call.1} parent=5 // pred_check
        _
      $region10: #{tpu_custom_call.1} parent=5 // pred_check_branch
        %163 = sbr.rel (%p160) target = $region12
      $region11: #{tpu_custom_call.1} parent=5 // pred_region
        %s164 = ssub.s32 %s14, 1
        // Predicated region
        $region13: #{tpu_custom_call.1} parent=11 // pred_check
          %p165 = pneg %p61
        $region14: #{tpu_custom_call.1} parent=11 // pred_check_branch
          %167 = sbr.rel (%p165) target = $region16
        $region15: #{tpu_custom_call.1} parent=11 // pred_region
          _
        $region16: #{tpu_custom_call.1} parent=11 // pred_fallthru
          _
        // Predicated region
        $region17: #{tpu_custom_call.1} parent=11 // pred_check
          %p168 = pneg %p82
        $region18: #{tpu_custom_call.1} parent=11 // pred_check_branch
          %170 = sbr.rel (%p168) target = $region20
        $region19: #{tpu_custom_call.1} parent=11 // pred_region
          _
        $region20: #{tpu_custom_call.1} parent=11 // pred_fallthru
          _
        // Predicated region
        $region21: #{tpu_custom_call.1} parent=11 // pred_check
          %p171 = pneg %p103
        $region22: #{tpu_custom_call.1} parent=11 // pred_check_branch
          %173 = sbr.rel (%p171) target = $region24
        $region23: #{tpu_custom_call.1} parent=11 // pred_region
          _
        $region24: #{tpu_custom_call.1} parent=11 // pred_fallthru
          _
        // Predicated region
        $region25: #{tpu_custom_call.1} parent=11 // pred_check
          %p174 = pneg %p124
        $region26: #{tpu_custom_call.1} parent=11 // pred_check_branch
          %176 = sbr.rel (%p174) target = $region28
        $region27: #{tpu_custom_call.1} parent=11 // pred_region
          _
        $region28: #{tpu_custom_call.1} parent=11 // pred_fallthru
          _
      $region12: #{tpu_custom_call.1} parent=5 // pred_fallthru
        _
      %p177 = scmp.lt.s32.totalorder %s14, 2
      // Predicated region
      $region29: #{tpu_custom_call.1} parent=5 // pred_check
        %p178 = pneg %p177
      $region30: #{tpu_custom_call.1} parent=5 // pred_check_branch
        %180 = sbr.rel (%p178) target = $region32
      $region31: #{tpu_custom_call.1} parent=5 // pred_region
        // Predicated region
        $region33: #{tpu_custom_call.1} parent=31 // pred_check
          %p181 = pneg %p34
        $region34: #{tpu_custom_call.1} parent=31 // pred_check_branch
          %183 = sbr.rel (%p181) target = $region36
        $region35: #{tpu_custom_call.1} parent=31 // pred_region
          %p184 = scmp.lt.s32.totalorder %s14, 1
          %s185 = scalar_select %p184, %s14, 1
          %s186 = smul.addr %s185, 8
          %s187 = scalar_lea.vmem %s0, %s186
        $region36: #{tpu_custom_call.1} parent=31 // pred_fallthru
          _
      $region32: #{tpu_custom_call.1} parent=5 // pred_fallthru
        _
      %p188 = scmp.le.s32.totalorder 1, %s14
      %p189 = scmp.lt.s32.totalorder %s14, 3
      %p190 = pnand %p188, %p189
      %p191 = pneg %p190
      // Predicated region
      $region37: #{tpu_custom_call.1} parent=5 // pred_check
        _
      $region38: #{tpu_custom_call.1} parent=5 // pred_check_branch
        %193 = sbr.rel (%p190) target = $region40
      $region39: #{tpu_custom_call.1} parent=5 // pred_region
        %s194 = ssub.s32 %s14, 1
        %p195 = scmp.lt.s32.totalorder %s19, 1
        %s196 = scalar_select %p195, %s19, 1
        %s197 = smul.addr %s196, 8
        %s198 = scalar_lea.vmem %s0, %s197
        %p199 = pneg %p40
        %p200 = pneg %p37
        %p201 = pneg %p61
        %p202 = pneg %p58
        %p203 = pneg %p82
        %p204 = pneg %p79
        %p205 = pneg %p103
        %p206 = pneg %p100
        %p207 = pneg %p124
        %p208 = pneg %p121
        %p209 = pneg %p150
        %p210 = pneg %p147
        %s211 = sand.u32 %s137, 1
        %s212 = scalar_lea.sflag [#allocation4], %s211
        %s213 = sand.u32 %s137, 1
        %s214 = smul.addr %s213, 8
        %s215 = scalar_lea.vmem [#allocation3], %s214
        %p216 = scmp.lt.s32.totalorder %s19, 1
        %s217 = scalar_select %p216, %s19, 1
        %s218 = smul.addr %s217, 8
        %s219 = scalar_lea.vmem %s0, %s218
        %vm221 = vcmask 11264
        %222 = vst.msk [vmem:[#allocation2] sm:$0xf] %vm221, 0
        %vm223 = vcmask 27664
        %224 = vst.msk [vmem:[#allocation2 + $0x4] sm:$0xf] %vm223, 0
        %v225 = vld [vmem:[%s2] sm:$0xff]
        %v226 = vld [vmem:[%s2 + $0x8] sm:$0xff]
        %v227 = vld [vmem:[%s2 + $0x10] sm:$0xff]
        %v228 = vld [vmem:[%s2 + $0x18] sm:$0xff]
        %v229 = vld [vmem:[%s4] sm:$0xff]
        %v230 = vld [vmem:[%s4 + $0x8] sm:$0xff]
        %v231 = vld [vmem:[%s219] sm:$0xff]
        %v232 = vpack.c.bf16 %v231, %v231
        %v234 = vunpack.c.l.b16 %v232
        %v235 = vpack.c.b16 %v234, %v234
        %236 = vrot.lane.b32.xlu0 %v235, 2
        %v237 = vpop.permute.xlu0 %236
        %v238 = vrot.slane %v237, 4
        %vm239 = vcmask 15360
        %v240 = vsel %vm239, %v238, %v237
        %vm242 = vcmask 1043472
        %vm243 = vcmask 15364
        %vm244 = vmor %vm243, %vm242
        %245 = vst.msk [vmem:[#allocation2] sm:$0xff] %vm244, %v240
        %v246 = vld [vmem:[#allocation2] sm:$0xf]
        %v247 = vld [vmem:[%s1] sm:$0xf]
        %v248 = vld [vmem:[%s1 + $0x4] sm:$0xf]
        %v249 = vld [vmem:[%s1 + $0x8] sm:$0xf]
        %v250 = vld [vmem:[%s1 + $0xc] sm:$0xf]
        %v251 = vld [vmem:[#allocation2] sm:$0xff]
        %s252 = scalar_lea.vmem %s1, 16
        %v253 = vld [vmem:[%s252] sm:$0xf]
        %v254 = vld [vmem:[%s252 + $0x4] sm:$0xf]
        %v255 = vld [vmem:[%s252 + $0x8] sm:$0xf]
        %v256 = vld [vmem:[%s252 + $0xc] sm:$0xf]
        %v261 = vunpack.c.l.b16 %v253
        %v262 = vunpack.c.l.b16 %v254
        %v263 = vunpack.c.l.b16 %v255
        %v264 = vunpack.c.l.b16 %v256
        %v265 = vpack.c.b16 %v262, %v261
        %v266 = vpack.c.b16 %v264, %v263
        %v268 = vunpack.c.l.b16 %v251
        %v269 = vunpack.c.h.b16 %v251
        %v270 = vpack.c.b16 %v268, %v268
        %v271 = vpack.c.b16 %v269, %v269
        %272 = vrot.lane.b32.xlu0 %v270, 126
        %v273 = vpop.permute.xlu0 %272
        %274 = vrot.lane.b32.xlu0 %v271, 126
        %v275 = vpop.permute.xlu0 %274
        %vm276 = vcmask 1031168
        %v277 = vsel %vm276, %v273, %v275
        %vm278 = vcmask 64512
        %v280 = vsel %vm278, %v265, 0
        %v283 = vsel %vm278, %v266, 0
        %vm285 = vcmask 1043456
        %v287 = vsel %vm285, %v277, 0
        %289 = vmatprep.subr.bf16.mxu0 0
        %290 = vmatpush1.bf16.msra.mxu0 0
        %291 = vmatprep.subr.bf16.mxu0 0
        %292 = vmatpush1.bf16.msra.mxu0 0
        %293 = vmatprep.subr.bf16.mxu0 0
        %294 = vmatpush1.bf16.msra.mxu0 0
        %295 = vmatprep.subr.bf16.mxu0 0
        %296 = vmatpush1.bf16.msra.mxu0 0
        %297 = vmatprep.subr.bf16.mxu0 0
        %298 = vmatpush1.bf16.msra.mxu0 0
        %299 = vmatprep.subr.bf16.mxu0 0
        %300 = vmatpush1.bf16.msra.mxu0 0
        %301 = vmatprep.subr.bf16.mxu0 0
        %302 = vmatpush1.bf16.msra.mxu0 0
        %303 = vmatprep.subr.bf16.mxu0 0
        %304 = vmatpush1.bf16.msra.mxu0 %v287
        %305 = vmatprep.subr.bf16.mxu0 0
        %306 = vmatpush2.bf16.msra.mxu0 0
        %307 = vmatprep.subr.bf16.mxu0 0
        %308 = vmatpush2.bf16.msra.mxu0 0
        %309 = vmatprep.subr.bf16.mxu0 0
        %310 = vmatpush2.bf16.msra.mxu0 0
        %311 = vmatprep.subr.bf16.mxu0 0
        %312 = vmatpush2.bf16.msra.mxu0 0
        %313 = vmatprep.subr.bf16.mxu0 0
        %314 = vmatpush2.bf16.msra.mxu0 0
        %315 = vmatprep.subr.bf16.mxu0 0
        %316 = vmatpush2.bf16.msra.mxu0 0
        %317 = vmatprep.subr.bf16.mxu0 0
        %318 = vmatpush2.bf16.msra.mxu0 0
        %319 = vmatprep.subr.bf16.mxu0 0
        %320 = vmatpush2.bf16.msra.mxu0 0
        %321 = vmatprep.mubr.bf16.mxu0 0
        %322 = vmatmul.mubr.bf16.gmra.mxu0 %v280
        %v323 = vpop.f32.mrf.mxu0
        %v324 = vadd.f32 0.0, %v323
        %v325 = vpop.f32.mrf.mxu0
        %v326 = vpop.f32.mrf.mxu0
        %v327 = vadd.f32 0.0, %v326
        %v328 = vpop.f32.mrf.mxu0
        %329 = vmatprep.mubr.bf16.mxu0 0
        %330 = vmatmul.mubr.bf16.gmra.mxu0 %v283
        %v331 = vpop.f32.mrf.mxu0
        %v332 = vadd.f32 0.0, %v331
        %v333 = vpop.f32.mrf.mxu0
        %v334 = vpop.f32.mrf.mxu0
        %v335 = vadd.f32 0.0, %v334
        %v336 = vpop.f32.mrf.mxu0
        %337 = vdwg.mxu0
        %v342 = vunpack.c.l.b16 %v247
        %v343 = vunpack.c.l.b16 %v248
        %v344 = vunpack.c.l.b16 %v249
        %v345 = vunpack.c.l.b16 %v250
        %v346 = vpack.c.b16 %v343, %v342
        %v347 = vpack.c.b16 %v345, %v344
        %v349 = vsel %vm278, %v346, 0
        %v352 = vsel %vm278, %v347, 0
        %v355 = vsel %vm285, %v246, 0
        %357 = vmatprep.subr.bf16.mxu0 0
        %358 = vmatpush1.bf16.msra.mxu0 0
        %359 = vmatprep.subr.bf16.mxu0 0
        %360 = vmatpush1.bf16.msra.mxu0 0
        %361 = vmatprep.subr.bf16.mxu0 0
        %362 = vmatpush1.bf16.msra.mxu0 0
        %363 = vmatprep.subr.bf16.mxu0 0
        %364 = vmatpush1.bf16.msra.mxu0 0
        %365 = vmatprep.subr.bf16.mxu0 0
        %366 = vmatpush1.bf16.msra.mxu0 0
        %367 = vmatprep.subr.bf16.mxu0 0
        %368 = vmatpush1.bf16.msra.mxu0 0
        %369 = vmatprep.subr.bf16.mxu0 0
        %370 = vmatpush1.bf16.msra.mxu0 0
        %371 = vmatprep.subr.bf16.mxu0 0
        %372 = vmatpush1.bf16.msra.mxu0 %v355
        %373 = vmatprep.subr.bf16.mxu0 0
        %374 = vmatpush2.bf16.msra.mxu0 0
        %375 = vmatprep.subr.bf16.mxu0 0
        %376 = vmatpush2.bf16.msra.mxu0 0
        %377 = vmatprep.subr.bf16.mxu0 0
        %378 = vmatpush2.bf16.msra.mxu0 0
        %379 = vmatprep.subr.bf16.mxu0 0
        %380 = vmatpush2.bf16.msra.mxu0 0
        %381 = vmatprep.subr.bf16.mxu0 0
        %382 = vmatpush2.bf16.msra.mxu0 0
        %383 = vmatprep.subr.bf16.mxu0 0
        %384 = vmatpush2.bf16.msra.mxu0 0
        %385 = vmatprep.subr.bf16.mxu0 0
        %386 = vmatpush2.bf16.msra.mxu0 0
        %387 = vmatprep.subr.bf16.mxu0 0
        %388 = vmatpush2.bf16.msra.mxu0 0
        %389 = vmatprep.mubr.bf16.mxu0 0
        %390 = vmatmul.mubr.bf16.gmra.mxu0 %v349
        %v391 = vpop.f32.mrf.mxu0
        %v392 = vadd.f32 %v324, %v391
        %v393 = vpop.f32.mrf.mxu0
        %v394 = vpop.f32.mrf.mxu0
        %v395 = vadd.f32 %v327, %v394
        %v396 = vpop.f32.mrf.mxu0
        %397 = vmatprep.mubr.bf16.mxu0 0
        %398 = vmatmul.mubr.bf16.gmra.mxu0 %v352
        %v399 = vpop.f32.mrf.mxu0
        %v400 = vadd.f32 %v332, %v399
        %v401 = vpop.f32.mrf.mxu0
        %v402 = vpop.f32.mrf.mxu0
        %v403 = vadd.f32 %v335, %v402
        %v404 = vpop.f32.mrf.mxu0
        %405 = vdwg.mxu0
        %s406 = scalar_lea.vmem %s1, 32
        %v407 = vld [vmem:[%s406] sm:$0xf]
        %v408 = vld [vmem:[%s406 + $0x4] sm:$0xf]
        %v409 = vld [vmem:[%s406 + $0x8] sm:$0xf]
        %v410 = vld [vmem:[%s406 + $0xc] sm:$0xf]
        %v415 = vunpack.c.l.b16 %v407
        %v416 = vunpack.c.l.b16 %v408
        %v417 = vunpack.c.l.b16 %v409
        %v418 = vunpack.c.l.b16 %v410
        %v419 = vpack.c.b16 %v416, %v415
        %v420 = vpack.c.b16 %v418, %v417
        %421 = vrot.lane.b32.xlu0 %v270, 124
        %v422 = vpop.permute.xlu0 %421
        %423 = vrot.lane.b32.xlu0 %v271, 124
        %v424 = vpop.permute.xlu0 %423
        %vm425 = vcmask 1014784
        %v426 = vsel %vm425, %v422, %v424
        %v428 = vsel %vm278, %v419, 0
        %v431 = vsel %vm278, %v420, 0
        %v434 = vsel %vm285, %v426, 0
        %436 = vmatprep.subr.bf16.mxu0 0
        %437 = vmatpush1.bf16.msra.mxu0 0
        %438 = vmatprep.subr.bf16.mxu0 0
        %439 = vmatpush1.bf16.msra.mxu0 0
        %440 = vmatprep.subr.bf16.mxu0 0
        %441 = vmatpush1.bf16.msra.mxu0 0
        %442 = vmatprep.subr.bf16.mxu0 0
        %443 = vmatpush1.bf16.msra.mxu0 0
        %444 = vmatprep.subr.bf16.mxu0 0
        %445 = vmatpush1.bf16.msra.mxu0 0
        %446 = vmatprep.subr.bf16.mxu0 0
        %447 = vmatpush1.bf16.msra.mxu0 0
        %448 = vmatprep.subr.bf16.mxu0 0
        %449 = vmatpush1.bf16.msra.mxu0 0
        %450 = vmatprep.subr.bf16.mxu0 0
        %451 = vmatpush1.bf16.msra.mxu0 %v434
        %452 = vmatprep.subr.bf16.mxu0 0
        %453 = vmatpush2.bf16.msra.mxu0 0
        %454 = vmatprep.subr.bf16.mxu0 0
        %455 = vmatpush2.bf16.msra.mxu0 0
        %456 = vmatprep.subr.bf16.mxu0 0
        %457 = vmatpush2.bf16.msra.mxu0 0
        %458 = vmatprep.subr.bf16.mxu0 0
        %459 = vmatpush2.bf16.msra.mxu0 0
        %460 = vmatprep.subr.bf16.mxu0 0
        %461 = vmatpush2.bf16.msra.mxu0 0
        %462 = vmatprep.subr.bf16.mxu0 0
        %463 = vmatpush2.bf16.msra.mxu0 0
        %464 = vmatprep.subr.bf16.mxu0 0
        %465 = vmatpush2.bf16.msra.mxu0 0
        %466 = vmatprep.subr.bf16.mxu0 0
        %467 = vmatpush2.bf16.msra.mxu0 0
        %468 = vmatprep.mubr.bf16.mxu0 0
        %469 = vmatmul.mubr.bf16.gmra.mxu0 %v428
        %v470 = vpop.f32.mrf.mxu0
        %v471 = vadd.f32 0.0, %v470
        %v472 = vpop.f32.mrf.mxu0
        %v473 = vpop.f32.mrf.mxu0
        %v474 = vadd.f32 0.0, %v473
        %v475 = vpop.f32.mrf.mxu0
        %476 = vmatprep.mubr.bf16.mxu0 0
        %477 = vmatmul.mubr.bf16.gmra.mxu0 %v431
        %v478 = vpop.f32.mrf.mxu0
        %v479 = vadd.f32 0.0, %v478
        %v480 = vpop.f32.mrf.mxu0
        %v481 = vpop.f32.mrf.mxu0
        %v482 = vadd.f32 0.0, %v481
        %v483 = vpop.f32.mrf.mxu0
        %484 = vdwg.mxu0
        %v485 = vadd.f32 %v392, %v471
        %v486 = vadd.f32 %v395, %v474
        %v487 = vadd.f32 %v400, %v479
        %v488 = vadd.f32 %v403, %v482
        %490 = vset.pattern.permute.xlu0 0
        %491 = vperm.xlu0 %490, %v225
        %v492 = vpop.permute.xlu0 %491
        %495 = vset.pattern.permute.xlu0 0
        %496 = vperm.xlu0 %495, %v226
        %v497 = vpop.permute.xlu0 %496
        %500 = vset.pattern.permute.xlu0 0
        %501 = vperm.xlu0 %500, %v227
        %v502 = vpop.permute.xlu0 %501
        %505 = vset.pattern.permute.xlu0 0
        %506 = vperm.xlu0 %505, %v228
        %v507 = vpop.permute.xlu0 %506
        %v509 = vadd.f32 %v485, %v492
        %v510 = vadd.f32 %v486, %v497
        %v511 = vadd.f32 %v487, %v502
        %v512 = vadd.f32 %v488, %v507
        %v513 = vxor.u32 %v511, 2147483648
        %v514 = vxor.u32 %v512, 2147483648
        %v515 = vmul.f32 %v513, 1.442695
        %v516 = vpow.pop %v515
        %v517 = vmul.f32 %v514, 1.442695
        %v518 = vpow.pop %v517
        %v519 = vadd.f32 %v516, 1.0
        %v520 = vadd.f32 %v518, 1.0
        %v521 = vrcp.pop %v519
        %v522 = vmul.f32 1.0, %v521
        %v523 = vrcp.pop %v520
        %v524 = vmul.f32 1.0, %v523
        %v525 = vmul.f32 %v509, %v522
        %v526 = vmul.f32 %v510, %v524
        %v527 = vmax.f32 %v525, 0.0
        %v528 = vmax.f32 %v526, 0.0
        %v529 = vmul.f32 %v527, 0.70710677
        %v530 = vmul.f32 %v528, 0.70710677
        %v531 = vtanh.pop %v529
        %v532 = vxor.u32 %v530, 2147483648
        %v533 = vmul.f32 %v532, 1.442695
        %v534 = vpow.pop %v533
        %v535 = vadd.f32 %v534, 1.0
        %v536 = vrcp.pop %v535
        %v537 = vmul.f32 1.0, %v536
        %v538 = vmul.f32 %v531, %v537
        %v539 = vld [vmem:[%s3] sm:$0xf]
        %v540 = vld [vmem:[%s3 + $0x4] sm:$0xf]
        %v541 = vpack.c.bf16 %v538, %v538
        %543 = vset.pattern.permute.xlu0 0
        %544 = vperm.xlu0 %543, %v229
        %v545 = vpop.permute.xlu0 %544
        %548 = vset.pattern.permute.xlu0 0
        %549 = vperm.xlu0 %548, %v230
        %v550 = vpop.permute.xlu0 %549
        %v554 = vunpack.c.l.b16 %v539
        %v555 = vunpack.c.l.b16 %v540
        %v556 = vpack.c.b16 %v555, %v554
        %v558 = vsel %vm278, %v556, 0
        %v561 = vsel %vm285, %v541, 0
        %563 = vmatprep.subr.bf16.mxu0 0
        %564 = vmatpush1.bf16.msra.mxu0 0
        %565 = vmatprep.subr.bf16.mxu0 0
        %566 = vmatpush1.bf16.msra.mxu0 0
        %567 = vmatprep.subr.bf16.mxu0 0
        %568 = vmatpush1.bf16.msra.mxu0 0
        %569 = vmatprep.subr.bf16.mxu0 0
        %570 = vmatpush1.bf16.msra.mxu0 0
        %571 = vmatprep.subr.bf16.mxu0 0
        %572 = vmatpush1.bf16.msra.mxu0 0
        %573 = vmatprep.subr.bf16.mxu0 0
        %574 = vmatpush1.bf16.msra.mxu0 0
        %575 = vmatprep.subr.bf16.mxu0 0
        %576 = vmatpush1.bf16.msra.mxu0 0
        %577 = vmatprep.subr.bf16.mxu0 0
        %578 = vmatpush1.bf16.msra.mxu0 %v561
        %579 = vmatprep.subr.bf16.mxu0 0
        %580 = vmatpush2.bf16.msra.mxu0 0
        %581 = vmatprep.subr.bf16.mxu0 0
        %582 = vmatpush2.bf16.msra.mxu0 0
        %583 = vmatprep.subr.bf16.mxu0 0
        %584 = vmatpush2.bf16.msra.mxu0 0
        %585 = vmatprep.subr.bf16.mxu0 0
        %586 = vmatpush2.bf16.msra.mxu0 0
        %587 = vmatprep.subr.bf16.mxu0 0
        %588 = vmatpush2.bf16.msra.mxu0 0
        %589 = vmatprep.subr.bf16.mxu0 0
        %590 = vmatpush2.bf16.msra.mxu0 0
        %591 = vmatprep.subr.bf16.mxu0 0
        %592 = vmatpush2.bf16.msra.mxu0 0
        %593 = vmatprep.subr.bf16.mxu0 0
        %594 = vmatpush2.bf16.msra.mxu0 0
        %595 = vmatprep.mubr.bf16.mxu0 0
        %596 = vmatmul.mubr.bf16.gmra.mxu0 %v558
        %v597 = vpop.f32.mrf.mxu0
        %v598 = vadd.f32 %v545, %v597
        %v599 = vpop.f32.mrf.mxu0
        %v600 = vpop.f32.mrf.mxu0
        %v601 = vadd.f32 %v550, %v600
        %v602 = vpop.f32.mrf.mxu0
        %603 = vdwg.mxu0
        %v604 = vxor.u32 %v601, 2147483648
        %v605 = vmul.f32 %v604, 1.442695
        %v606 = vpow.pop %v605
        %v607 = vadd.f32 %v606, 1.0
        %v608 = vrcp.pop %v607
        %v609 = vmul.f32 1.0, %v608
        %v610 = vmul.f32 %v598, %v609
        %v611 = vadd.f32 %v610, %v538
        %v612 = vmax.f32 %v611, 0.0
        %v613 = vmul.f32 %v612, 0.70710677
        %v614 = vld [vmem:[%s219] sm:$0xff]
        %v615 = vadd.f32 %v613, %v614
        %616 = vst [vmem:[%s215] sm:$0xff] %v615
        %s617 = sand.u32 %s137, 1
        %s618 = scalar_lea.sflag [#allocation4], %s617
        %s619 = sand.u32 %s137, 1
        %s620 = smul.addr %s619, 8
        %s621 = scalar_lea.vmem [#allocation3], %s620
        // Predicated region
        $region41: #{tpu_custom_call.1} parent=39 // pred_check
          %p622 = pneg %p147
        $region42: #{tpu_custom_call.1} parent=39 // pred_check_branch
          %624 = sbr.rel (%p622) target = $region44
        $region43: #{tpu_custom_call.1} parent=39 // pred_region
          %s626 = ssub.s32 128, 128
          %627 = vsyncadd %s618, %s626
          %s628 = smul.addr %s19, 128
          %s629 = scalar_lea.hbm %s5, %s628
          %s631 = sshll.u32 %s621, 4
          %s632 = int_to_ptr.vmem [resolvable:$true] %s631
          %634 = dma.vmem_to_hbm [thread:$0]  %s632, 128, %s629, %s618
        $region44: #{tpu_custom_call.1} parent=39 // pred_fallthru
          _
      $region40: #{tpu_custom_call.1} parent=5 // pred_fallthru
        _
      %p635 = scmp.le.s32.totalorder 2, %s14
      // Predicated region
      $region45: #{tpu_custom_call.1} parent=5 // pred_check
        %p636 = pneg %p635
      $region46: #{tpu_custom_call.1} parent=5 // pred_check_branch
        %638 = sbr.rel (%p636) target = $region48
      $region47: #{tpu_custom_call.1} parent=5 // pred_region
        %s639 = ssub.s32 %s14, 2
        // Predicated region
        $region49: #{tpu_custom_call.1} parent=47 // pred_check
          %p640 = pneg %p153
        $region50: #{tpu_custom_call.1} parent=47 // pred_check_branch
          %642 = sbr.rel (%p640) target = $region52
        $region51: #{tpu_custom_call.1} parent=47 // pred_region
          %s643 = sand.u32 %s138, 1
          %s644 = scalar_lea.sflag [#allocation4], %s643
          %s645 = sand.u32 %s138, 1
          %s646 = smul.addr %s645, 8
          %s647 = scalar_lea.vmem [#allocation3], %s646
          %648 = dma.done %s644, 128
        $region52: #{tpu_custom_call.1} parent=47 // pred_fallthru
          _
      $region48: #{tpu_custom_call.1} parent=5 // pred_fallthru
        _
    $region6: #{tpu_custom_call.1} parent=1 // loop_footer
      %s18 = sadd.s32 1, %s14
    $region7: #{tpu_custom_call.1} parent=1 // loop_footer_branch
      %13 = sbr.rel target = $region3
    $region8: #{tpu_custom_call.1} parent=1 // loop_exit
      _
    %649 = vsyncpa [#allocation4], 1
    %s650 = scalar_lea.sflag [#allocation4], 1
    %651 = vsyncpa %s650, 1

</llo_original>
